<compile_context>
chip_gen: v5e
topology: v5e:2x2
jax: 0.10.0
libtpu: 0.0.40
codegen_flags: <defaults>
</compile_context>

<pallas_src>
import jax
import jax.numpy as jnp
from jax.experimental import pallas as pl
from jax.experimental.pallas import tpu as pltpu

# ---- CCNN hyper-parameters (constructor args, chosen small & consistent) ----
MIN_DISTANCE = 5                       # ROI side length R; decode scale = R - 1
ANCHOR_SIZE = (MIN_DISTANCE, MIN_DISTANCE)
MAX_CORNERS = 8                        # K_ROI: fixed number of proposals/image
QUALITY_LEVEL = 0.002
SCORE_THRESH = 0.5
NMS_THRESH = 0.6
REG_RATIO = 0.8
C_HID = 32                             # synthetic predictor hidden channels


# --------------------------- Pallas kernels ---------------------------------
def _roll2d(a, s, axis):
    n = a.shape[axis]
    s = s % n
    if s == 0:
        return a
    return pltpu.roll(a, s, axis)


def corner_response_kernel(img_ref, r_ref):
    """Shi-Tomasi min-eigenvalue corner response with fused grayscale mean.

    img_ref: (C, H, W) one image; r_ref: (H, W) response.
    Separable 3x3 box filter: 4 rolls per input instead of 12.
    """
    g = jnp.mean(img_ref[...], axis=0)                    # fused grayscale (H, W)

    ix = (_roll2d(g, -1, 1) - _roll2d(g, 1, 1)) * 0.5     # central differences
    iy = (_roll2d(g, -1, 0) - _roll2d(g, 1, 0)) * 0.5
    ixx, iyy, ixy = ix * ix, iy * iy, ix * iy

    def box3(a):                                          # separable 3x3 box sum
        r = a + _roll2d(a, -1, 0) + _roll2d(a, 1, 0)      # row (sublane) pass
        return r + _roll2d(r, -1, 1) + _roll2d(r, 1, 1)   # column (lane) pass

    sxx, syy, sxy = box3(ixx), box3(iyy), box3(ixy)
    tr = (sxx + syy) * 0.5
    rad = jnp.sqrt(((sxx - syy) * 0.5) ** 2 + sxy * sxy)
    r_ref[...] = tr - rad                                 # smaller eigenvalue


def make_predictor_kernel(k_roi, p, img_h, img_w, min_distance):
    """Fused predictor: conv3x3(im2col matmul, bias folded) -> ReLU -> GAP
    (precomputed pooling matmul) -> fused loc/score head (bias folded) ->
    sigmoid -> CCNN._decode_loc -> clip_boxes_to_image.

    Output is a single lane-dense (K, 8) block: cols 0:4 decoded boxes,
    col 4 score, cols 5:8 zero padding.
    """

    def kernel(patch_ref, wconv_ref, pool_ref, whead_ref, upleft_ref, out_ref):
        # conv3x3 via im2col matmul (bias folded via ones column / bias row)
        feat = jnp.dot(patch_ref[...], wconv_ref[...],
                       preferred_element_type=jnp.float32)
        feat = jnp.maximum(feat, 0.0)                     # (K*P, C_HID+1); last col == 1

        # global average pool per ROI via precomputed pooling matrix
        pooled = jnp.dot(pool_ref[...], feat,
                         preferred_element_type=jnp.float32)   # (K, C_HID+1)

        # fused loc+score head (biases folded through the constant-1 channel)
        raw = jnp.dot(pooled, whead_ref[...],
                      preferred_element_type=jnp.float32)      # (K, 8)
        sig = 1.0 / (1.0 + jnp.exp(-raw))

        # CCNN._decode_loc + O.clip_boxes_to_image on the 4 loc columns.
        col = jax.lax.broadcasted_iota(jnp.int32, (k_roi, 8), 1)
        dec = sig * float(min_distance - 1) + upleft_ref[...]
        dec = jnp.where(col < 2, jnp.floor(dec), jnp.ceil(dec))
        maxv = jnp.where(col % 2 == 0, float(img_w), float(img_h))
        dec = jnp.minimum(jnp.maximum(dec, 0.0), maxv)

        out_ref[...] = jnp.where(col < 4, dec,
                                 jnp.where(col == 4, sig, 0.0))

    return kernel


# ------------------------------ JAX glue -------------------------------------
def im2col_3x3(rois):
    """(B, K, C, R, R) -> (B, K*R*R, C*9) with zero padding (conv padding=1)."""
    B, K, C, R, _ = rois.shape
    xp = jnp.pad(rois, ((0, 0), (0, 0), (0, 0), (1, 1), (1, 1)))
    cols = []
    for dy in range(3):
        for dx in range(3):
            cols.append(xp[..., dy:dy + R, dx:dx + R])
    col = jnp.stack(cols, axis=3)                         # (B, K, C, 9, R, R)
    col = jnp.transpose(col, (0, 1, 4, 5, 2, 3))          # (B, K, R, R, C, 9)
    return col.reshape(B, K * R * R, C * 9)


def _pairwise_iou(boxes):
    x1, y1, x2, y2 = boxes[:, 0], boxes[:, 1], boxes[:, 2], boxes[:, 3]
    area = jnp.maximum(x2 - x1, 0.0) * jnp.maximum(y2 - y1, 0.0)
    ix1 = jnp.maximum(x1[:, None], x1[None, :])
    iy1 = jnp.maximum(y1[:, None], y1[None, :])
    ix2 = jnp.minimum(x2[:, None], x2[None, :])
    iy2 = jnp.minimum(y2[:, None], y2[None, :])
    inter = jnp.maximum(ix2 - ix1, 0.0) * jnp.maximum(iy2 - iy1, 0.0)
    union = area[:, None] + area[None, :] - inter
    return jnp.where(union > 0.0, inter / union, 0.0)


def postprocess_detections(boxes, scores, score_thresh, nms_thresh):
    """Fixed-size version of CCNN.postprocess_detections: returns a keep mask."""
    labels = jnp.where(scores > score_thresh, 1, 0).astype(jnp.int32)
    valid = scores > score_thresh
    w = boxes[:, 2] - boxes[:, 0]
    h = boxes[:, 3] - boxes[:, 1]
    valid = valid & (w >= 1e-3) & (h >= 1e-3)             # remove_small_boxes

    # NMS (greedy, score-descending) with fixed-size keep mask.
    K = boxes.shape[0]
    order = jnp.argsort(-scores)
    b_s = boxes[order]
    v_s = valid[order]
    iou = _pairwise_iou(b_s)
    idxs = jnp.arange(K)

    def body(i, keep):
        sup = jnp.any((iou[i] > nms_thresh) & keep & (idxs < i))
        return keep.at[i].set(keep[i] & jnp.logical_not(sup))

    keep_s = jax.lax.fori_loop(0, K, body, v_s)
    keep = jnp.zeros((K,), bool).at[order].set(keep_s)
    return boxes, scores, labels, keep


def make_params(key, c_in, c_hid):
    k1, k2, k3 = jax.random.split(key, 3)
    # torch Conv2d weight (C_hid, C_in, 3, 3) flattened to (C_in*9, C_hid),
    # matching im2col ordering index = c*9 + dy*3 + dx.
    w_conv = 0.1 * jax.random.normal(k1, (c_hid, c_in, 3, 3), jnp.float32)
    w_conv = w_conv.reshape(c_hid, c_in * 9).T
    b_conv = jnp.zeros((1, c_hid), jnp.float32)
    w_loc = 0.1 * jax.random.normal(k2, (c_hid, 4), jnp.float32)
    b_loc = jnp.zeros((1, 4), jnp.float32)
    w_score = 0.1 * jax.random.normal(k3, (c_hid, 1), jnp.float32)
    b_score = jnp.zeros((1, 1), jnp.float32)
    return dict(w_conv=w_conv, b_conv=b_conv, w_loc=w_loc, b_loc=b_loc,
                w_score=w_score, b_score=b_score)


def build_predictor_operands(params, c_in, c_hid):
    """Fold biases into the weights and fuse the two heads.

    Returns:
      w_conv_aug: (C*9+1, C_HID+1) bf16 — conv weight with bias row; last
                  column produces a constant-1 channel (carries head biases).
      w_head_aug: (C_HID+1, 8) f32 — [w_loc | w_score | 0pad] with bias row.
    """
    kc = c_in * 9
    w_conv_aug = jnp.concatenate([params["w_conv"], params["b_conv"]], axis=0)  # (Kc+1, CH)
    ones_col = jnp.zeros((kc + 1, 1), jnp.float32).at[kc, 0].set(1.0)
    w_conv_aug = jnp.concatenate([w_conv_aug, ones_col], axis=1)                # (Kc+1, CH+1)
    w_conv_aug = w_conv_aug.astype(jnp.bfloat16)

    w_head_aug = jnp.zeros((c_hid + 1, 8), jnp.float32)
    w_head_aug = w_head_aug.at[:c_hid, 0:4].set(params["w_loc"])
    w_head_aug = w_head_aug.at[:c_hid, 4:5].set(params["w_score"])
    w_head_aug = w_head_aug.at[c_hid, 0:4].set(params["b_loc"][0])
    w_head_aug = w_head_aug.at[c_hid, 4].set(params["b_score"][0, 0])
    return w_conv_aug, w_head_aug


def ccnn_forward(images, params):
    B, C, H, W = images.shape
    R = MIN_DISTANCE
    K = MAX_CORNERS
    P = R * R
    Kc = C * 9

    # --- AnchorGenerator: corner response (Pallas, grayscale fused) ----------
    resp = pl.pallas_call(
        corner_response_kernel,
        out_shape=jax.ShapeDtypeStruct((B, H, W), jnp.float32),
        grid=(B,),
        in_specs=[pl.BlockSpec((None, C, H, W), lambda b: (b, 0, 0, 0))],
        out_specs=pl.BlockSpec((None, H, W), lambda b: (b, 0, 0)),
        compiler_params=pltpu.CompilerParams(dimension_semantics=("parallel",)),
    )(images)

    flat = resp.reshape(B, H * W)
    # quality_level threshold; clamp max at 0 so a non-positive response map
    # does not invert the mask.
    maxr = jnp.maximum(jnp.max(flat, axis=1, keepdims=True), 0.0)
    masked = jnp.where(flat >= QUALITY_LEVEL * maxr, flat, -jnp.inf)
    # TODO(synk): min_distance suppression between corners (cv2.goodFeaturesToTrack) not implemented; plain top-k instead.
    _, idx = jax.lax.top_k(masked, K)
    ys = idx // W
    xs = idx % W
    ul_y = jnp.clip(ys - R // 2, 0, H - R)
    ul_x = jnp.clip(xs - R // 2, 0, W - R)

    # --- CornerProposal (eval): extract fixed-size ROI patches (glue) --------
    def extract_one(img, uy, ux):
        return jax.lax.dynamic_slice(img, (0, uy, ux), (C, R, R))

    rois = jax.vmap(lambda img, uys, uxs:
                    jax.vmap(lambda uy, ux: extract_one(img, uy, ux))(uys, uxs)
                    )(images, ul_y, ul_x)                 # (B, K, C, R, R)
    # roi_uplefts stored as (x, y); decode adds cat((ul, ul), 1) = [x, y, x, y]
    upleft4 = jnp.stack([ul_x, ul_y, ul_x, ul_y], axis=-1).astype(jnp.float32)
    upleft8 = jnp.concatenate([upleft4, jnp.zeros_like(upleft4)], axis=-1)      # (B, K, 8)

    patches = im2col_3x3(rois)                            # (B, K*P, Kc)
    ones = jnp.ones((B, K * P, 1), jnp.float32)
    patches_aug = jnp.concatenate([patches, ones], axis=-1).astype(jnp.bfloat16)

    # Folded / fused predictor weights and the hoisted GAP pooling matrix.
    w_conv_aug, w_head_aug = build_predictor_operands(params, C, C_HID)
    rows = jnp.arange(K)[:, None]
    cols = jnp.arange(K * P)[None, :]
    pool = jnp.where(cols // P == rows, 1.0 / P, 0.0).astype(jnp.float32)       # (K, K*P)

    # --- predictor + _decode_loc + clip: one fused lane-dense Pallas kernel --
    kern = make_predictor_kernel(K, P, H, W, MIN_DISTANCE)
    out8 = pl.pallas_call(
        kern,
        out_shape=jax.ShapeDtypeStruct((B, K, 8), jnp.float32),
        grid=(B,),
        in_specs=[
            pl.BlockSpec((None, K * P, Kc + 1), lambda b: (b, 0, 0)),
            pl.BlockSpec((Kc + 1, C_HID + 1), lambda b: (0, 0)),
            pl.BlockSpec((K, K * P), lambda b: (0, 0)),
            pl.BlockSpec((C_HID + 1, 8), lambda b: (0, 0)),
            pl.BlockSpec((None, K, 8), lambda b: (b, 0, 0)),
        ],
        out_specs=pl.BlockSpec((None, K, 8), lambda b: (b, 0, 0)),
        compiler_params=pltpu.CompilerParams(dimension_semantics=("parallel",)),
    )(patches_aug, w_conv_aug, pool, w_head_aug, upleft8)

    boxes = out8[:, :, 0:4]                               # (B, K, 4)
    scores = out8[:, :, 4]                                # (B, K)  (flatten(start_dim=0))

    # --- postprocess_detections (eval path) -----------------------------------
    detections = []
    for b in range(B):
        locs_b, scores_b, labels_b, keep_b = postprocess_detections(
            boxes[b], scores[b], SCORE_THRESH, NMS_THRESH)
        detections.append({"boxes": locs_b, "scores": scores_b,
                           "labels": labels_b, "keep": keep_b})
    return detections


if __name__ == "__main__":
    key = jax.random.PRNGKey(0)
    kimg, kpar = jax.random.split(key)
    B, C, H, W = 2, 4, 16, 16
    images = jax.random.uniform(kimg, (B, C, H, W), dtype=jnp.float32)
    params = make_params(kpar, C, C_HID)
    dets = ccnn_forward(images, params)
    jax.block_until_ready(dets)
    print("KERNEL_OK")
</pallas_src>

<mosaic_0001>
module attributes {stable_mosaic.version = 11 : i64} {
  func.func @corner_response_kernel(%arg0: i32, %arg1: memref<1x4x16x16xf32, #tpu.memory_space<vmem>>, %arg2: memref<1x16x16xf32, #tpu.memory_space<vmem>>) attributes {dimension_semantics = [#tpu.dimension_semantics<parallel>], iteration_bounds = array<i64: 2>, scalar_prefetch = 0 : i64, scratch_operands = 0 : i64, tpu.core_type = #tpu.core_type<tc>, window_params = [{transform_indices = @transform_0, window_bounds = array<i64: 1, 4, 16, 16>}, {transform_indices = @transform_1, window_bounds = array<i64: 1, 16, 16>}]} {
    %c0 = arith.constant 0 : index
    %c0_0 = arith.constant 0 : index
    %c0_1 = arith.constant 0 : index
    %c0_2 = arith.constant 0 : index
    %0 = vector.load %arg1[%c0, %c0_0, %c0_1, %c0_2] : memref<1x4x16x16xf32, #tpu.memory_space<vmem>>, vector<1x4x16x16xf32>
    %1 = vector.shape_cast %0 : vector<1x4x16x16xf32> to vector<4x16x16xf32>
    %cst = arith.constant dense<0.000000e+00> : vector<16x16xf32>
    %2 = vector.multi_reduction <add>, %1, %cst [0] : vector<4x16x16xf32> to vector<16x16xf32>
    %cst_3 = arith.constant 4.000000e+00 : f32
    %3 = vector.broadcast %cst_3 : f32 to vector<16x16xf32>
    %4 = arith.divf %2, %3 : vector<16x16xf32>
    %c15_i32 = arith.constant 15 : i32
    %5 = tpu.dynamic_rotate %4 by %c15_i32 dim 1 : vector<16x16xf32>, i32 -> vector<16x16xf32>
    %c1_i32 = arith.constant 1 : i32
    %6 = tpu.dynamic_rotate %4 by %c1_i32 dim 1 : vector<16x16xf32>, i32 -> vector<16x16xf32>
    %7 = arith.subf %5, %6 : vector<16x16xf32>
    %cst_4 = arith.constant 5.000000e-01 : f32
    %8 = vector.broadcast %cst_4 : f32 to vector<16x16xf32>
    %9 = arith.mulf %7, %8 : vector<16x16xf32>
    %c15_i32_5 = arith.constant 15 : i32
    %10 = tpu.dynamic_rotate %4 by %c15_i32_5 dim 0 : vector<16x16xf32>, i32 -> vector<16x16xf32>
    %c1_i32_6 = arith.constant 1 : i32
    %11 = tpu.dynamic_rotate %4 by %c1_i32_6 dim 0 : vector<16x16xf32>, i32 -> vector<16x16xf32>
    %12 = arith.subf %10, %11 : vector<16x16xf32>
    %cst_7 = arith.constant 5.000000e-01 : f32
    %13 = vector.broadcast %cst_7 : f32 to vector<16x16xf32>
    %14 = arith.mulf %12, %13 : vector<16x16xf32>
    %15 = arith.mulf %9, %9 : vector<16x16xf32>
    %16 = arith.mulf %14, %14 : vector<16x16xf32>
    %17 = arith.mulf %9, %14 : vector<16x16xf32>
    %c15_i32_8 = arith.constant 15 : i32
    %18 = tpu.dynamic_rotate %15 by %c15_i32_8 dim 0 : vector<16x16xf32>, i32 -> vector<16x16xf32>
    %19 = arith.addf %15, %18 : vector<16x16xf32>
    %c1_i32_9 = arith.constant 1 : i32
    %20 = tpu.dynamic_rotate %15 by %c1_i32_9 dim 0 : vector<16x16xf32>, i32 -> vector<16x16xf32>
    %21 = arith.addf %19, %20 : vector<16x16xf32>
    %c15_i32_10 = arith.constant 15 : i32
    %22 = tpu.dynamic_rotate %21 by %c15_i32_10 dim 1 : vector<16x16xf32>, i32 -> vector<16x16xf32>
    %23 = arith.addf %21, %22 : vector<16x16xf32>
    %c1_i32_11 = arith.constant 1 : i32
    %24 = tpu.dynamic_rotate %21 by %c1_i32_11 dim 1 : vector<16x16xf32>, i32 -> vector<16x16xf32>
    %25 = arith.addf %23, %24 : vector<16x16xf32>
    %c15_i32_12 = arith.constant 15 : i32
    %26 = tpu.dynamic_rotate %16 by %c15_i32_12 dim 0 : vector<16x16xf32>, i32 -> vector<16x16xf32>
    %27 = arith.addf %16, %26 : vector<16x16xf32>
    %c1_i32_13 = arith.constant 1 : i32
    %28 = tpu.dynamic_rotate %16 by %c1_i32_13 dim 0 : vector<16x16xf32>, i32 -> vector<16x16xf32>
    %29 = arith.addf %27, %28 : vector<16x16xf32>
    %c15_i32_14 = arith.constant 15 : i32
    %30 = tpu.dynamic_rotate %29 by %c15_i32_14 dim 1 : vector<16x16xf32>, i32 -> vector<16x16xf32>
    %31 = arith.addf %29, %30 : vector<16x16xf32>
    %c1_i32_15 = arith.constant 1 : i32
    %32 = tpu.dynamic_rotate %29 by %c1_i32_15 dim 1 : vector<16x16xf32>, i32 -> vector<16x16xf32>
    %33 = arith.addf %31, %32 : vector<16x16xf32>
    %c15_i32_16 = arith.constant 15 : i32
    %34 = tpu.dynamic_rotate %17 by %c15_i32_16 dim 0 : vector<16x16xf32>, i32 -> vector<16x16xf32>
    %35 = arith.addf %17, %34 : vector<16x16xf32>
    %c1_i32_17 = arith.constant 1 : i32
    %36 = tpu.dynamic_rotate %17 by %c1_i32_17 dim 0 : vector<16x16xf32>, i32 -> vector<16x16xf32>
    %37 = arith.addf %35, %36 : vector<16x16xf32>
    %c15_i32_18 = arith.constant 15 : i32
    %38 = tpu.dynamic_rotate %37 by %c15_i32_18 dim 1 : vector<16x16xf32>, i32 -> vector<16x16xf32>
    %39 = arith.addf %37, %38 : vector<16x16xf32>
    %c1_i32_19 = arith.constant 1 : i32
    %40 = tpu.dynamic_rotate %37 by %c1_i32_19 dim 1 : vector<16x16xf32>, i32 -> vector<16x16xf32>
    %41 = arith.addf %39, %40 : vector<16x16xf32>
    %42 = arith.addf %25, %33 : vector<16x16xf32>
    %cst_20 = arith.constant 5.000000e-01 : f32
    %43 = vector.broadcast %cst_20 : f32 to vector<16x16xf32>
    %44 = arith.mulf %42, %43 : vector<16x16xf32>
    %45 = arith.subf %25, %33 : vector<16x16xf32>
    %cst_21 = arith.constant 5.000000e-01 : f32
    %46 = vector.broadcast %cst_21 : f32 to vector<16x16xf32>
    %47 = arith.mulf %45, %46 : vector<16x16xf32>
    %48 = arith.mulf %47, %47 : vector<16x16xf32>
    %49 = arith.mulf %41, %41 : vector<16x16xf32>
    %50 = arith.addf %48, %49 : vector<16x16xf32>
    %51 = math.sqrt %50 : vector<16x16xf32>
    %52 = arith.subf %44, %51 : vector<16x16xf32>
    %c0_22 = arith.constant 0 : index
    %c0_23 = arith.constant 0 : index
    %c0_24 = arith.constant 0 : index
    %53 = vector.load %arg2[%c0_22, %c0_23, %c0_24] : memref<1x16x16xf32, #tpu.memory_space<vmem>>, vector<1x16x16xf32>
    %54 = vector.shape_cast %53 : vector<1x16x16xf32> to vector<16x16xf32>
    %55 = vector.shape_cast %52 : vector<16x16xf32> to vector<1x16x16xf32>
    tpu.vector_store %arg2[%c0_22, %c0_23, %c0_24], %55 {strides = array<i32>} : memref<1x16x16xf32, #tpu.memory_space<vmem>>, vector<1x16x16xf32>,
    return
  }
  func.func @transform_0(%arg0: i32) -> (i32, i32, i32, i32) {
    %c0_i32 = arith.constant 0 : i32
    %c0_i32_0 = arith.constant 0 : i32
    %c0_i32_1 = arith.constant 0 : i32
    %c0_i32_2 = arith.constant 0 : i32
    return %arg0, %c0_i32, %c0_i32_0, %c0_i32_1 : i32, i32, i32, i32
  }
  func.func @transform_1(%arg0: i32) -> (i32, i32, i32) {
    %c0_i32 = arith.constant 0 : i32
    %c0_i32_0 = arith.constant 0 : i32
    %c0_i32_1 = arith.constant 0 : i32
    return %arg0, %c0_i32, %c0_i32_0 : i32, i32, i32
  }
}

</mosaic_0001>

<llo_original>
// kernel: tpu_custom_call.1
$region0: #{tpu_custom_call.1}
  #allocation0 [shape = 'u32[]', space=smem, size = 0x4, offset = 0x4, fixed_abs, tag = 'smem constant byte address 0x4 - core index']
  #allocation1 [shape = 'u32[72,128]{1,0:T(1,128)}', space=vmem, size = 0x9000, scoped, tag = 'internal scratch']
  %s0 = inlined_call_operand.hbm [shape: f32[2,4,16,16], index: 0, kind: input, shape index: {}]
  %s1 = inlined_call_operand.hbm [shape: f32[2,16,16], index: 1, kind: output, shape index: {}]
  %s2 = sld [smem:[#allocation0]]
  $region41: #{tpu_custom_call.1} parent=0
    _
  %s4 = ssub.s32 1, %s2
  %s5 = scalar_select 0, %s4, %s2
  $region1: #{tpu_custom_call.1} parent=0
    #allocation2 [shape = 'u8[65536]{0}', space=vmem, size = 0x10000, scoped, tag = 'input window, operand 0']
    #allocation3 [shape = 's32[2]{0}', space=sflag, size = 0x8, scoped, tag = 'scoped memory for tpu_custom_call.1']
    #allocation4 [shape = 's32[2]{0}', space=sflag, size = 0x8, scoped, tag = 'scoped memory for tpu_custom_call.1']
    #allocation5 [shape = 'u8[16384]{0}', space=vmem, size = 0x4000, scoped, tag = 'output window, operand 0']
    %6 = vsyncpa [#allocation3], 0
    %s7 = scalar_lea.sflag [#allocation3], 1
    %8 = vsyncpa %s7, 0
    %9 = vsyncpa [#allocation4], 0
    %s10 = scalar_lea.sflag [#allocation4], 1
    %11 = vsyncpa %s10, 0
    loop: start=0, step=1, limit=4
    $region2: #{tpu_custom_call.1} parent=1 // loop_pre_header
      _
    $region3: #{tpu_custom_call.1} parent=1 // loop_header
      %s13 = sphi 0, %s17
      %p14 = scmp.ge.s32.totalorder %s13, 4
      %s23 = sphi 0, %s25
      %s26 = sphi 0, %s23
      %s27 = sphi 0, %s26
      %s43 = sphi 0, %s27
      %s49 = sphi 0, %s51
      %s52 = sphi 0, %s49
      %s53 = sphi 0, %s52
      %s69 = sphi 0, %s53
    $region4: #{tpu_custom_call.1} parent=1 // loop_header_branch
      %16 = sbr.rel (%p14) target = $region8
    $region5: #{tpu_custom_call.1} parent=1 // loop_body
      %s18 = ssub.s32 %s13, 1
      %s19 = ssub.s32 %s13, 2
      %s20 = sadd.s32 %s13, 1
      %s21 = ssub.s32 %s13, %s20
      %p22 = scmp.eq.s32.totalorder %s21, 0
      %s24 = sadd.s32 %s23, 1
      %s25 = scalar_select %p22, %s23, %s24
      %p28 = pneg %p22
      %p29 = scmp.eq.s32.totalorder %s13, 1
      %p30 = por %p28, %p29
      %p31 = scmp.ne.s32.totalorder %s23, %s26
      %p32 = scmp.eq.s32.totalorder %s13, 0
      %p33 = por %p31, %p32
      %p34 = scmp.ne.s32.totalorder %s23, %s26
      %p35 = scmp.eq.s32.totalorder %s18, 1
      %p36 = por %p34, %p35
      %p37 = scmp.ne.s32.totalorder %s26, %s27
      %p38 = scmp.eq.s32.totalorder %s18, 0
      %p39 = por %p37, %p38
      %p40 = scmp.ne.s32.totalorder %s26, %s27
      %p41 = scmp.eq.s32.totalorder %s19, 1
      %p42 = por %p40, %p41
      %p44 = scmp.ne.s32.totalorder %s27, %s43
      %p45 = scmp.eq.s32.totalorder %s19, 0
      %p46 = por %p44, %p45
      %s47 = ssub.s32 %s13, %s20
      %p48 = scmp.eq.s32.totalorder %s47, 0
      %s50 = sadd.s32 %s49, 1
      %s51 = scalar_select %p48, %s49, %s50
      %p54 = pneg %p48
      %p55 = scmp.eq.s32.totalorder %s13, 1
      %p56 = por %p54, %p55
      %p57 = scmp.ne.s32.totalorder %s49, %s52
      %p58 = scmp.eq.s32.totalorder %s13, 0
      %p59 = por %p57, %p58
      %p60 = scmp.ne.s32.totalorder %s49, %s52
      %p61 = scmp.eq.s32.totalorder %s18, 1
      %p62 = por %p60, %p61
      %p63 = scmp.ne.s32.totalorder %s52, %s53
      %p64 = scmp.eq.s32.totalorder %s18, 0
      %p65 = por %p63, %p64
      %p66 = scmp.ne.s32.totalorder %s52, %s53
      %p67 = scmp.eq.s32.totalorder %s19, 1
      %p68 = por %p66, %p67
      %p70 = scmp.ne.s32.totalorder %s53, %s69
      %p71 = scmp.eq.s32.totalorder %s19, 0
      %p72 = por %p70, %p71
      %p73 = scmp.le.s32.totalorder 1, %s13
      %p74 = scmp.lt.s32.totalorder %s13, 3
      %p75 = pnand %p73, %p74
      %p76 = pneg %p75
      // Predicated region
      $region9: #{tpu_custom_call.1} parent=5 // pred_check
        _
      $region10: #{tpu_custom_call.1} parent=5 // pred_check_branch
        %78 = sbr.rel (%p75) target = $region12
      $region11: #{tpu_custom_call.1} parent=5 // pred_region
        %s79 = ssub.s32 %s13, 1
      $region12: #{tpu_custom_call.1} parent=5 // pred_fallthru
        _
      %p80 = scmp.lt.s32.totalorder %s13, 2
      // Predicated region
      $region13: #{tpu_custom_call.1} parent=5 // pred_check
        %p81 = pneg %p80
      $region14: #{tpu_custom_call.1} parent=5 // pred_check_branch
        %83 = sbr.rel (%p81) target = $region16
      $region15: #{tpu_custom_call.1} parent=5 // pred_region
        // Predicated region
        $region17: #{tpu_custom_call.1} parent=15 // pred_check
          %p84 = pneg %p33
        $region18: #{tpu_custom_call.1} parent=15 // pred_check_branch
          %86 = sbr.rel (%p84) target = $region20
        $region19: #{tpu_custom_call.1} parent=15 // pred_region
          %s87 = sand.u32 %s23, 1
          %s88 = scalar_lea.sflag [#allocation3], %s87
          %s89 = sand.u32 %s23, 1
          %s90 = smul.addr %s89, 64
          %s91 = scalar_lea.vmem [#allocation2], %s90
          %93 = vsyncadd %s88, 0
          %s94 = smul.addr %s13, 8
          %s95 = smul.addr %s94, 8
          %s96 = scalar_lea.hbm %s0, %s95
          %s97 = sshll.u32 %s96, 4
          %s98 = int_to_ptr.hbm [resolvable:$true] %s97
          %s99 = sshll.u32 %s91, 4
          %s100 = int_to_ptr.vmem [resolvable:$true] %s99
          %105 = dma.hbm_to_vmem [thread:$0]  %s98, 1024, %s100, %s88, 128, 128, 8
        $region20: #{tpu_custom_call.1} parent=15 // pred_fallthru
          _
      $region16: #{tpu_custom_call.1} parent=5 // pred_fallthru
        _
      %p106 = scmp.le.s32.totalorder 1, %s13
      %p107 = scmp.lt.s32.totalorder %s13, 3
      %p108 = pnand %p106, %p107
      %p109 = pneg %p108
      // Predicated region
      $region21: #{tpu_custom_call.1} parent=5 // pred_check
        _
      $region22: #{tpu_custom_call.1} parent=5 // pred_check_branch
        %111 = sbr.rel (%p108) target = $region24
      $region23: #{tpu_custom_call.1} parent=5 // pred_region
        %s112 = ssub.s32 %s13, 1
        %s113 = sand.u32 %s26, 1
        %s114 = scalar_lea.sflag [#allocation3], %s113
        %s115 = sand.u32 %s26, 1
        %s116 = smul.addr %s115, 64
        %s117 = scalar_lea.vmem [#allocation2], %s116
        // Predicated region
        $region25: #{tpu_custom_call.1} parent=23 // pred_check
          %p118 = pneg %p39
        $region26: #{tpu_custom_call.1} parent=23 // pred_check_branch
          %120 = sbr.rel (%p118) target = $region28
        $region27: #{tpu_custom_call.1} parent=23 // pred_region
          %122 = dma.done %s114, 1024
        $region28: #{tpu_custom_call.1} parent=23 // pred_fallthru
          _
        %s123 = sand.u32 %s26, 1
        %s124 = scalar_lea.sflag [#allocation3], %s123
        %s125 = sand.u32 %s26, 1
        %s126 = smul.addr %s125, 64
        %s127 = scalar_lea.vmem [#allocation2], %s126
        %p128 = pneg %p39
        %p129 = pneg %p36
        %p130 = pneg %p65
        %p131 = pneg %p62
        %s132 = sand.u32 %s52, 1
        %s133 = scalar_lea.sflag [#allocation4], %s132
        %s134 = sand.u32 %s52, 1
        %s135 = smul.addr %s134, 16
        %s136 = scalar_lea.vmem [#allocation5], %s135
        %v137 = vld [vmem:[%s117] sm:$0xff]
        %v138 = vld [vmem:[%s117 + $0x8] sm:$0xff]
        %v139 = vld [vmem:[%s117 + $0x10] sm:$0xff]
        %v140 = vld [vmem:[%s117 + $0x18] sm:$0xff]
        %v141 = vld [vmem:[%s117 + $0x20] sm:$0xff]
        %v142 = vld [vmem:[%s117 + $0x28] sm:$0xff]
        %v143 = vld [vmem:[%s117 + $0x30] sm:$0xff]
        %v144 = vld [vmem:[%s117 + $0x38] sm:$0xff]
        %vm145 = vcmask 130048
        %v146 = vsel %vm145, %v137, 0.0
        %v147 = vsel %vm145, %v139, 0.0
        %v148 = vadd.f32 %v146, %v147
        %v149 = vsel %vm145, %v141, 0.0
        %v150 = vadd.f32 %v148, %v149
        %v151 = vsel %vm145, %v143, 0.0
        %v152 = vadd.f32 %v150, %v151
        %v153 = vsel %vm145, %v138, 0.0
        %v154 = vsel %vm145, %v140, 0.0
        %v155 = vadd.f32 %v153, %v154
        %v156 = vsel %vm145, %v142, 0.0
        %v157 = vadd.f32 %v155, %v156
        %v158 = vsel %vm145, %v144, 0.0
        %v159 = vadd.f32 %v157, %v158
        %v160 = vrcp.pop 4.0
        %v161 = vmul.f32 4.0, %v160
        %v162 = vsub.f32 1.0, %v161
        %v163 = vmul.f32 %v160, %v162
        %v164 = vadd.f32 %v160, %v163
        %vm165 = vweird.f32 %v160
        %v166 = vsel %vm165, %v160, %v164
        %v167 = vmul.f32 %v152, %v166
        %v168 = vmul.f32 %v159, %v166
        %vm169 = vcmask 1047680
        %170 = vrot.lane.b32.xlu0 %v167, 16
        %v171 = vpop.permute.xlu0 %170
        %v172 = vsel %vm169, %v171, %v167
        %173 = vrot.lane.b32.xlu0 %v168, 16
        %v174 = vpop.permute.xlu0 %173
        %v175 = vsel %vm169, %v174, %v168
        %176 = vrot.lane.b32.xlu0 %v172, 16
        %v177 = vpop.permute.xlu0 %176
        %178 = vrot.lane.b32.xlu0 %v175, 16
        %v179 = vpop.permute.xlu0 %178
        %v180 = vsel %vm169, %v177, %v167
        %v181 = vsel %vm169, %v179, %v168
        %184 = vrot.lane.b32.xlu0 %v180, 114
        %v185 = vpop.permute.xlu0 %184
        %186 = vrot.lane.b32.xlu0 %v181, 114
        %v187 = vpop.permute.xlu0 %186
        %v190 = vsub.f32 %v180, %v185
        %v191 = vsub.f32 %v181, %v187
        %v192 = vmul.f32 %v190, 0.5
        %v193 = vmul.f32 %v191, 0.5
        %v194 = vrot.slane %v167, 1
        %v195 = vrot.slane %v168, 1
        %v196 = vlaneseq
        %v197 = vshrl.u32 %v196, 7
        %vm198 = vcmp.lt.s32.totalorder %v197, 7
        %v199 = vsel %vm198, %v194, %v195
        %v200 = vsel %vm198, %v195, %v194
        %v201 = vrot.slane %v167, 7
        %v202 = vrot.slane %v168, 7
        %vm203 = vcmp.lt.s32.totalorder %v197, 1
        %v204 = vsel %vm203, %v201, %v202
        %v205 = vsel %vm203, %v202, %v201
        %v206 = vsub.f32 %v199, %v205
        %v207 = vsub.f32 %v200, %v204
        %v208 = vmul.f32 %v206, 0.5
        %v209 = vmul.f32 %v207, 0.5
        %v210 = vmul.f32 %v192, %v192
        %v211 = vmul.f32 %v193, %v193
        %v212 = vmul.f32 %v208, %v208
        %v213 = vmul.f32 %v209, %v209
        %216 = vrot.lane.b32.xlu0 %v208, 1
        %v217 = vpop.permute.xlu0 %216
        %218 = vrot.lane.b32.xlu0 %v209, 1
        %v219 = vpop.permute.xlu0 %218
        %v222 = vmul.f32 %v192, %v217
        %v223 = vmul.f32 %v193, %v219
        %226 = vrot.lane.b32.xlu0 %v210, 127
        %v227 = vpop.permute.xlu0 %226
        %228 = vrot.lane.b32.xlu0 %v211, 127
        %v229 = vpop.permute.xlu0 %228
        %v232 = vrot.slane %v227, 1
        %v233 = vrot.slane %v229, 1
        %v234 = vsel %vm198, %v232, %v233
        %v235 = vsel %vm198, %v233, %v232
        %238 = vrot.lane.b32.xlu0 %v234, 1
        %v239 = vpop.permute.xlu0 %238
        %240 = vrot.lane.b32.xlu0 %v235, 1
        %v241 = vpop.permute.xlu0 %240
        %v244 = vadd.f32 %v210, %v239
        %v245 = vadd.f32 %v211, %v241
        %v246 = vrot.slane %v227, 7
        %v247 = vrot.slane %v229, 7
        %v248 = vsel %vm203, %v246, %v247
        %v249 = vsel %vm203, %v247, %v246
        %252 = vrot.lane.b32.xlu0 %v249, 1
        %v253 = vpop.permute.xlu0 %252
        %254 = vrot.lane.b32.xlu0 %v248, 1
        %v255 = vpop.permute.xlu0 %254
        %v258 = vadd.f32 %v244, %v253
        %v259 = vadd.f32 %v245, %v255
        %262 = vrot.lane.b32.xlu0 %v258, 127
        %v263 = vpop.permute.xlu0 %262
        %264 = vrot.lane.b32.xlu0 %v259, 127
        %v265 = vpop.permute.xlu0 %264
        %268 = vrot.lane.b32.xlu0 %v263, 16
        %v269 = vpop.permute.xlu0 %268
        %v270 = vsel %vm169, %v269, %v263
        %271 = vrot.lane.b32.xlu0 %v265, 16
        %v272 = vpop.permute.xlu0 %271
        %v273 = vsel %vm169, %v272, %v265
        %274 = vrot.lane.b32.xlu0 %v270, 16
        %v275 = vpop.permute.xlu0 %274
        %276 = vrot.lane.b32.xlu0 %v273, 16
        %v277 = vpop.permute.xlu0 %276
        %v278 = vsel %vm169, %v275, %v263
        %v279 = vsel %vm169, %v277, %v265
        %v280 = vadd.f32 %v258, %v278
        %v281 = vadd.f32 %v259, %v279
        %284 = vrot.lane.b32.xlu0 %v278, 114
        %v285 = vpop.permute.xlu0 %284
        %286 = vrot.lane.b32.xlu0 %v279, 114
        %v287 = vpop.permute.xlu0 %286
        %v290 = vadd.f32 %v280, %v285
        %v291 = vadd.f32 %v281, %v287
        %v292 = vrot.slane %v212, 1
        %v293 = vrot.slane %v213, 1
        %v294 = vsel %vm198, %v292, %v293
        %v295 = vsel %vm198, %v293, %v292
        %v296 = vadd.f32 %v212, %v294
        %v297 = vadd.f32 %v213, %v295
        %v298 = vrot.slane %v212, 7
        %v299 = vrot.slane %v213, 7
        %v300 = vsel %vm203, %v298, %v299
        %v301 = vsel %vm203, %v299, %v298
        %v302 = vadd.f32 %v296, %v301
        %v303 = vadd.f32 %v297, %v300
        %304 = vrot.lane.b32.xlu0 %v302, 16
        %v305 = vpop.permute.xlu0 %304
        %v306 = vsel %vm169, %v305, %v302
        %307 = vrot.lane.b32.xlu0 %v303, 16
        %v308 = vpop.permute.xlu0 %307
        %v309 = vsel %vm169, %v308, %v303
        %310 = vrot.lane.b32.xlu0 %v306, 16
        %v311 = vpop.permute.xlu0 %310
        %312 = vrot.lane.b32.xlu0 %v309, 16
        %v313 = vpop.permute.xlu0 %312
        %v314 = vsel %vm169, %v311, %v302
        %v315 = vsel %vm169, %v313, %v303
        %318 = vrot.lane.b32.xlu0 %v314, 127
        %v319 = vpop.permute.xlu0 %318
        %320 = vrot.lane.b32.xlu0 %v315, 127
        %v321 = vpop.permute.xlu0 %320
        %v324 = vadd.f32 %v302, %v319
        %v325 = vadd.f32 %v303, %v321
        %326 = vrot.lane.b32.xlu0 %v314, 113
        %v327 = vpop.permute.xlu0 %326
        %328 = vrot.lane.b32.xlu0 %v315, 113
        %v329 = vpop.permute.xlu0 %328
        %v332 = vadd.f32 %v324, %v327
        %v333 = vadd.f32 %v325, %v329
        %336 = vrot.lane.b32.xlu0 %v222, 127
        %v337 = vpop.permute.xlu0 %336
        %338 = vrot.lane.b32.xlu0 %v223, 127
        %v339 = vpop.permute.xlu0 %338
        %v342 = vrot.slane %v337, 1
        %v343 = vrot.slane %v339, 1
        %v344 = vsel %vm198, %v342, %v343
        %v345 = vsel %vm198, %v343, %v342
        %348 = vrot.lane.b32.xlu0 %v344, 1
        %v349 = vpop.permute.xlu0 %348
        %350 = vrot.lane.b32.xlu0 %v345, 1
        %v351 = vpop.permute.xlu0 %350
        %v354 = vadd.f32 %v222, %v349
        %v355 = vadd.f32 %v223, %v351
        %v356 = vrot.slane %v337, 7
        %v357 = vrot.slane %v339, 7
        %v358 = vsel %vm203, %v356, %v357
        %v359 = vsel %vm203, %v357, %v356
        %362 = vrot.lane.b32.xlu0 %v359, 1
        %v363 = vpop.permute.xlu0 %362
        %364 = vrot.lane.b32.xlu0 %v358, 1
        %v365 = vpop.permute.xlu0 %364
        %v368 = vadd.f32 %v354, %v363
        %v369 = vadd.f32 %v355, %v365
        %372 = vrot.lane.b32.xlu0 %v368, 127
        %v373 = vpop.permute.xlu0 %372
        %374 = vrot.lane.b32.xlu0 %v369, 127
        %v375 = vpop.permute.xlu0 %374
        %378 = vrot.lane.b32.xlu0 %v373, 16
        %v379 = vpop.permute.xlu0 %378
        %v380 = vsel %vm169, %v379, %v373
        %381 = vrot.lane.b32.xlu0 %v375, 16
        %v382 = vpop.permute.xlu0 %381
        %v383 = vsel %vm169, %v382, %v375
        %384 = vrot.lane.b32.xlu0 %v380, 16
        %v385 = vpop.permute.xlu0 %384
        %386 = vrot.lane.b32.xlu0 %v383, 16
        %v387 = vpop.permute.xlu0 %386
        %v388 = vsel %vm169, %v385, %v373
        %v389 = vsel %vm169, %v387, %v375
        %v390 = vadd.f32 %v368, %v388
        %v391 = vadd.f32 %v369, %v389
        %394 = vrot.lane.b32.xlu0 %v388, 114
        %v395 = vpop.permute.xlu0 %394
        %396 = vrot.lane.b32.xlu0 %v389, 114
        %v397 = vpop.permute.xlu0 %396
        %v400 = vadd.f32 %v390, %v395
        %v401 = vadd.f32 %v391, %v397
        %404 = vrot.lane.b32.xlu0 %v332, 1
        %v405 = vpop.permute.xlu0 %404
        %406 = vrot.lane.b32.xlu0 %v333, 1
        %v407 = vpop.permute.xlu0 %406
        %v410 = vadd.f32 %v290, %v405
        %v411 = vadd.f32 %v291, %v407
        %v412 = vmul.f32 %v410, 0.5
        %v413 = vmul.f32 %v411, 0.5
        %v414 = vsub.f32 %v290, %v405
        %v415 = vsub.f32 %v291, %v407
        %v416 = vmul.f32 %v414, 0.5
        %v417 = vmul.f32 %v415, 0.5
        %v418 = vmul.f32 %v416, %v416
        %v419 = vmul.f32 %v417, %v417
        %v420 = vmul.f32 %v400, %v400
        %v421 = vmul.f32 %v401, %v401
        %v422 = vadd.f32 %v418, %v420
        %v423 = vadd.f32 %v419, %v421
        %v424 = vrsqrt.pop %v422
        %v425 = vmul.f32 %v424, %v422
        %v426 = vmul.f32 %v425, %v424
        %v427 = vmul.f32 0.5, %v426
        %v428 = vsub.f32 1.5, %v427
        %v429 = vmul.f32 %v424, %v428
        %v430 = vmul.f32 %v422, %v429
        %vm431 = vcmp.eq.f32.partialorder %v422, inf
        %v432 = vsel %vm431, %v422, %v430
        %vm433 = vcmp.eq.f32.partialorder %v422, 0.0
        %v434 = vand.u32 %v422, 2147483648
        %v435 = vsel %vm433, %v434, %v432
        %v436 = vrsqrt.pop %v423
        %v437 = vmul.f32 %v436, %v423
        %v438 = vmul.f32 %v437, %v436
        %v439 = vmul.f32 0.5, %v438
        %v440 = vsub.f32 1.5, %v439
        %v441 = vmul.f32 %v436, %v440
        %v442 = vmul.f32 %v423, %v441
        %vm443 = vcmp.eq.f32.partialorder %v423, inf
        %v444 = vsel %vm443, %v423, %v442
        %vm445 = vcmp.eq.f32.partialorder %v423, 0.0
        %v446 = vand.u32 %v423, 2147483648
        %v447 = vsel %vm445, %v446, %v444
        %v448 = vsub.f32 %v412, %v435
        %v449 = vsub.f32 %v413, %v447
        %452 = vrot.lane.b32.xlu0 %v448, 127
        %v453 = vpop.permute.xlu0 %452
        %454 = vrot.lane.b32.xlu0 %v449, 127
        %v455 = vpop.permute.xlu0 %454
        %458 = vst.msk [vmem:[%s136] sm:$0xff] %vm145, %v453
        %459 = vst.msk [vmem:[%s136 + $0x8] sm:$0xff] %vm145, %v455
        %s460 = sand.u32 %s52, 1
        %s461 = scalar_lea.sflag [#allocation4], %s460
        %s462 = sand.u32 %s52, 1
        %s463 = smul.addr %s462, 16
        %s464 = scalar_lea.vmem [#allocation5], %s463
        // Predicated region
        $region29: #{tpu_custom_call.1} parent=23 // pred_check
          %p465 = pneg %p62
        $region30: #{tpu_custom_call.1} parent=23 // pred_check_branch
          %467 = sbr.rel (%p465) target = $region32
        $region31: #{tpu_custom_call.1} parent=23 // pred_region
          %469 = vsyncadd %s461, 0
          %s470 = smul.addr %s18, 2
          %s471 = smul.addr %s470, 8
          %s472 = scalar_lea.hbm %s1, %s471
          %s473 = sshll.u32 %s464, 4
          %s474 = int_to_ptr.vmem [resolvable:$true] %s473
          %s475 = sshll.u32 %s472, 4
          %s476 = int_to_ptr.hbm [resolvable:$true] %s475
          %481 = dma.vmem_to_hbm [thread:$0]  %s474, 256, %s476, %s461, 128, 128, 8
        $region32: #{tpu_custom_call.1} parent=23 // pred_fallthru
          _
      $region24: #{tpu_custom_call.1} parent=5 // pred_fallthru
        _
      %p482 = scmp.le.s32.totalorder 2, %s13
      // Predicated region
      $region33: #{tpu_custom_call.1} parent=5 // pred_check
        %p483 = pneg %p482
      $region34: #{tpu_custom_call.1} parent=5 // pred_check_branch
        %485 = sbr.rel (%p483) target = $region36
      $region35: #{tpu_custom_call.1} parent=5 // pred_region
        %s486 = ssub.s32 %s13, 2
        // Predicated region
        $region37: #{tpu_custom_call.1} parent=35 // pred_check
          %p487 = pneg %p68
        $region38: #{tpu_custom_call.1} parent=35 // pred_check_branch
          %489 = sbr.rel (%p487) target = $region40
        $region39: #{tpu_custom_call.1} parent=35 // pred_region
          %s490 = sand.u32 %s53, 1
          %s491 = scalar_lea.sflag [#allocation4], %s490
          %s492 = sand.u32 %s53, 1
          %s493 = smul.addr %s492, 16
          %s494 = scalar_lea.vmem [#allocation5], %s493
          %496 = dma.done %s491, 256
        $region40: #{tpu_custom_call.1} parent=35 // pred_fallthru
          _
      $region36: #{tpu_custom_call.1} parent=5 // pred_fallthru
        _
    $region6: #{tpu_custom_call.1} parent=1 // loop_footer
      %s17 = sadd.s32 1, %s13
    $region7: #{tpu_custom_call.1} parent=1 // loop_footer_branch
      %12 = sbr.rel target = $region3
    $region8: #{tpu_custom_call.1} parent=1 // loop_exit
      _
    %497 = vsyncpa [#allocation3], 1
    %s498 = scalar_lea.sflag [#allocation3], 1
    %499 = vsyncpa %s498, 1
    %500 = vsyncpa [#allocation4], 1
    %s501 = scalar_lea.sflag [#allocation4], 1
    %502 = vsyncpa %s501, 1

</llo_original>
